<compile_context>
chip_gen: v5e
topology: v5e:2x2
jax: 0.10.0
libtpu: 0.0.40
codegen_flags: <defaults>
</compile_context>

<pallas_src>
import jax
import jax.numpy as jnp
from jax import lax
from jax.experimental import pallas as pl
from jax.experimental.pallas import tpu as pltpu

_S1, _P1 = 4, 1    # conv1 stride / padding (fixed by the module)
_S2, _P2 = 4, 1    # conv2 stride / padding (fixed by the module)


def _conv_out(size, k, stride, pad):
    return (size + 2 * pad - k) // stride + 1


def _effective_weights(w1, b1, w2, b2, c_in, h, w):
    """Compose conv2(conv1(x)) into a single affine map per output position.

    Returns W_eff (F_out, C*H*W) and b_eff (F_out,) with
    flatten(conv2(conv1(x))) == x.reshape(N, -1) @ W_eff.T + b_eff.
    Zero-padding of both convolutions is handled exactly by only accumulating
    index combinations that hit real (non-padded) elements.
    Tiny, static-shaped, traced once under jit.
    """
    k1 = w1.shape[-1]
    k2 = w2.shape[-1]
    ho1, wo1 = _conv_out(h, k1, _S1, _P1), _conv_out(w, k1, _S1, _P1)
    ho2, wo2 = _conv_out(ho1, k2, _S2, _P2), _conv_out(wo1, k2, _S2, _P2)
    f_out = ho2 * wo2

    w1 = w1.reshape(c_in, k1, k1).astype(jnp.float32)
    w2 = w2.reshape(k2, k2).astype(jnp.float32)
    b1 = jnp.reshape(b1, ()).astype(jnp.float32)
    b2 = jnp.reshape(b2, ()).astype(jnp.float32)

    w_eff = jnp.zeros((f_out, c_in, h, w), jnp.float32)
    b_eff = jnp.zeros((f_out,), jnp.float32)

    for oi in range(ho2):
        for oj in range(wo2):
            f = oi * wo2 + oj
            bacc = b2
            for kh in range(k2):
                i = _S2 * oi - _P2 + kh
                if not 0 <= i < ho1:
                    continue                       # conv2 tap reads conv1's zero padding
                for kw in range(k2):
                    j = _S2 * oj - _P2 + kw
                    if not 0 <= j < wo1:
                        continue
                    bacc = bacc + b1 * w2[kh, kw]  # conv1 bias flows through this tap
                    h0 = _S1 * i - _P1
                    w0 = _S1 * j - _P1
                    rs = [r for r in range(k1) if 0 <= h0 + r < h]
                    qs = [q for q in range(k1) if 0 <= w0 + q < w]
                    if not rs or not qs:
                        continue                   # all conv1 taps hit x's zero padding
                    patch = w2[kh, kw] * w1[:, rs[0]:rs[-1] + 1, qs[0]:qs[-1] + 1]
                    w_eff = w_eff.at[f, :,
                                     h0 + rs[0]:h0 + rs[-1] + 1,
                                     w0 + qs[0]:w0 + qs[-1] + 1].add(patch)
            b_eff = b_eff.at[f].set(bacc)

    return w_eff.reshape(f_out, c_in * h * w), b_eff, ho2, wo2


def _make_kernel(f_out, d):
    """out[n, f] = sum_d x[n, d] * w[f, d] + b[f] on the VPU (no MXU)."""
    chunk = 128
    chunked = (d % chunk == 0) and (d > chunk)

    def kernel(x_ref, w_ref, b_ref, o_ref):
        x = x_ref[...]                                  # (tn, d) f32, VMEM
        cols = []
        for f in range(f_out):
            prod = x * w_ref[f:f + 1, :]                # (tn, d) VPU multiply
            if chunked:
                # Two partial accumulators over 128-lane chunks (break the
                # serial add chain), then one cross-lane reduce on the XLU.
                acc0 = prod[:, 0:chunk]
                acc1 = prod[:, chunk:2 * chunk]
                for cidx in range(2, d // chunk):
                    sl = prod[:, cidx * chunk:(cidx + 1) * chunk]
                    if cidx % 2 == 0:
                        acc0 = acc0 + sl
                    else:
                        acc1 = acc1 + sl
                red = jnp.sum(acc0 + acc1, axis=-1, keepdims=True)
            else:
                red = jnp.sum(prod, axis=-1, keepdims=True)
            cols.append(red + b_ref[f])                 # SMEM scalar bias
        out = cols[0] if f_out == 1 else jnp.concatenate(cols, axis=-1)
        o_ref[...] = out                                # (tn, f_out), no broadcast
    return kernel


def _pick_batch_tile(n, d):
    """Batch tile: multiple of 8 dividing n, capped by a ~4 MiB VMEM budget
    (safe for v5e/v6e 128 MiB and v7x 64 MiB with double buffering)."""
    if n <= 8 or n % 8 != 0:
        return n                                        # single full block
    budget_rows = max(8, (4 << 20) // (4 * d))
    t = max(8, min(n, 1024, (budget_rows // 8) * 8))
    while t > 8 and n % t != 0:
        t -= 8
    return t if n % t == 0 else n


@jax.jit
def _fused_forward(x, w1, b1, w2, b2):
    x = x.astype(jnp.float32)
    n, c_in, h, w = x.shape
    d = c_in * h * w

    w_eff, b_eff, ho2, wo2 = _effective_weights(w1, b1, w2, b2, c_in, h, w)
    f_out = ho2 * wo2

    x2 = x.reshape(n, d)                 # contiguous reshape: no HBM rearrangement pass
    tn = _pick_batch_tile(n, d)
    grid = (n // tn,)

    cost = pl.CostEstimate(
        flops=2 * n * d * f_out,
        transcendentals=0,
        bytes_accessed=(n * d + f_out * d + n * f_out) * 4,
    )

    out = pl.pallas_call(
        _make_kernel(f_out, d),
        out_shape=jax.ShapeDtypeStruct((n, f_out), jnp.float32),
        grid=grid,
        in_specs=[
            pl.BlockSpec((tn, d), lambda i: (i, 0)),              # x batch tile (lane-dense)
            pl.BlockSpec((f_out, d), lambda i: (0, 0)),           # fused weights, VMEM-resident
            pl.BlockSpec(memory_space=pltpu.MemorySpace.SMEM),    # fused bias scalars
        ],
        out_specs=pl.BlockSpec((tn, f_out), lambda i: (i, 0)),
        compiler_params=pltpu.CompilerParams(
            dimension_semantics=("parallel",)),                   # 2-TC sharding on v7x
        cost_estimate=cost,
    )(x2, w_eff, b_eff)

    return out                             # (n, f_out) == flatten(1, -1)


class TestModelPallas:
    """Pallas TPU port of TestModel: Conv2d(3,1,3,4,1) -> Conv2d(1,1,3,4,1) -> flatten."""

    def __init__(self, key):
        k1, k2, k3, k4 = jax.random.split(key, 4)
        # Conv2d(3, 1, 3, stride=4, padding=1) — PyTorch-style uniform init
        bound1 = (3 * 3 * 3) ** -0.5
        self.w1 = jax.random.uniform(k1, (1, 3, 3, 3), jnp.float32, -bound1, bound1)
        self.b1 = jax.random.uniform(k2, (1,), jnp.float32, -bound1, bound1)
        # Conv2d(1, 1, 3, stride=4, padding=1)
        bound2 = (1 * 3 * 3) ** -0.5
        self.w2 = jax.random.uniform(k3, (1, 1, 3, 3), jnp.float32, -bound2, bound2)
        self.b2 = jax.random.uniform(k4, (1,), jnp.float32, -bound2, bound2)

    def __call__(self, x):
        return _fused_forward(x, self.w1, self.b1, self.w2, self.b2)


# ------------------------------ reference check -------------------------------
def _ref_conv(x, w, b, stride, pad):
    y = lax.conv_general_dilated(
        x, w, window_strides=(stride, stride),
        padding=((pad, pad), (pad, pad)),
        dimension_numbers=("NCHW", "OIHW", "NCHW"))
    return y + b.reshape(1, -1, 1, 1)


def _ref_forward(model, x):
    y = _ref_conv(x, model.w1, model.b1, 4, 1)
    y = _ref_conv(y, model.w2, model.b2, 4, 1)
    return y.reshape(y.shape[0], -1)


if __name__ == "__main__":
    key = jax.random.PRNGKey(0)
    kx, kp = jax.random.split(key)
    x = jax.random.normal(kx, (2, 3, 16, 16), jnp.float32)

    model = TestModelPallas(kp)
    out = jax.block_until_ready(model(x))

    ref = _ref_forward(model, x)
    assert out.shape == (2, 1), out.shape
    assert jnp.allclose(out, ref, atol=1e-5, rtol=1e-5), (out, ref)

    print("KERNEL_OK")
</pallas_src>

<mosaic_0001>
module attributes {stable_mosaic.version = 11 : i64} {
  func.func @kernel(%arg0: i32, %arg1: memref<2x768xf32, #tpu.memory_space<vmem>>, %arg2: memref<1x768xf32, #tpu.memory_space<vmem>>, %arg3: memref<1xf32, #tpu.memory_space<smem>>, %arg4: memref<2x1xf32, #tpu.memory_space<vmem>>) attributes {dimension_semantics = [#tpu.dimension_semantics<parallel>], iteration_bounds = array<i64: 1>, scalar_prefetch = 0 : i64, scratch_operands = 0 : i64, tpu.core_type = #tpu.core_type<tc>, window_params = [{transform_indices = @transform_0, window_bounds = array<i64: 2, 768>}, {pipeline_mode = #tpu.pipeline_mode<synchronous>, transform_indices = @transform_1, window_bounds = array<i64: 1, 768>}, {transform_indices = @transform_2, window_bounds = array<i64: 1>}, {transform_indices = @transform_3, window_bounds = array<i64: 2, 1>}]} {
    %c0 = arith.constant 0 : index
    %c0_0 = arith.constant 0 : index
    %0 = vector.load %arg1[%c0, %c0_0] : memref<2x768xf32, #tpu.memory_space<vmem>>, vector<2x768xf32>
    %c0_1 = arith.constant 0 : index
    %c0_2 = arith.constant 0 : index
    %1 = vector.load %arg2[%c0_1, %c0_2] : memref<1x768xf32, #tpu.memory_space<vmem>>, vector<1x768xf32>
    %2 = vector.broadcast %1 : vector<1x768xf32> to vector<2x768xf32>
    %3 = arith.mulf %0, %2 : vector<2x768xf32>
    %4 = vector.extract_strided_slice %3 {offsets = [0, 0], sizes = [2, 128], strides = [1, 1]} : vector<2x768xf32> to vector<2x128xf32>
    %5 = vector.extract_strided_slice %3 {offsets = [0, 128], sizes = [2, 128], strides = [1, 1]} : vector<2x768xf32> to vector<2x128xf32>
    %6 = vector.extract_strided_slice %3 {offsets = [0, 256], sizes = [2, 128], strides = [1, 1]} : vector<2x768xf32> to vector<2x128xf32>
    %7 = arith.addf %4, %6 : vector<2x128xf32>
    %8 = vector.extract_strided_slice %3 {offsets = [0, 384], sizes = [2, 128], strides = [1, 1]} : vector<2x768xf32> to vector<2x128xf32>
    %9 = arith.addf %5, %8 : vector<2x128xf32>
    %10 = vector.extract_strided_slice %3 {offsets = [0, 512], sizes = [2, 128], strides = [1, 1]} : vector<2x768xf32> to vector<2x128xf32>
    %11 = arith.addf %7, %10 : vector<2x128xf32>
    %12 = vector.extract_strided_slice %3 {offsets = [0, 640], sizes = [2, 128], strides = [1, 1]} : vector<2x768xf32> to vector<2x128xf32>
    %13 = arith.addf %9, %12 : vector<2x128xf32>
    %14 = arith.addf %11, %13 : vector<2x128xf32>
    %cst = arith.constant dense<0.000000e+00> : vector<2xf32>
    %15 = vector.multi_reduction <add>, %14, %cst [1] : vector<2x128xf32> to vector<2xf32>
    %16 = vector.shape_cast %15 : vector<2xf32> to vector<2x1xf32>
    %c0_3 = arith.constant 0 : index
    %17 = memref.load %arg3[%c0_3] : memref<1xf32, #tpu.memory_space<smem>>
    %18 = vector.broadcast %17 : f32 to vector<2x1xf32>
    %19 = arith.addf %16, %18 : vector<2x1xf32>
    %c0_4 = arith.constant 0 : index
    %c0_5 = arith.constant 0 : index
    %20 = vector.load %arg4[%c0_4, %c0_5] : memref<2x1xf32, #tpu.memory_space<vmem>>, vector<2x1xf32>
    tpu.vector_store %arg4[%c0_4, %c0_5], %19 {strides = array<i32>} : memref<2x1xf32, #tpu.memory_space<vmem>>, vector<2x1xf32>,
    return
  }
  func.func @transform_0(%arg0: i32) -> (i32, i32) {
    %c0_i32 = arith.constant 0 : i32
    %c0_i32_0 = arith.constant 0 : i32
    return %arg0, %c0_i32 : i32, i32
  }
  func.func @transform_1(%arg0: i32) -> (i32, i32) {
    %c0_i32 = arith.constant 0 : i32
    %c0_i32_0 = arith.constant 0 : i32
    %c0_i32_1 = arith.constant 0 : i32
    return %c0_i32, %c0_i32_0 : i32, i32
  }
  func.func @transform_2(%arg0: i32) -> i32 {
    %c0_i32 = arith.constant 0 : i32
    %c0_i32_0 = arith.constant 0 : i32
    return %c0_i32 : i32
  }
  func.func @transform_3(%arg0: i32) -> (i32, i32) {
    %c0_i32 = arith.constant 0 : i32
    %c0_i32_0 = arith.constant 0 : i32
    return %arg0, %c0_i32 : i32, i32
  }
}

</mosaic_0001>

<llo_original>
// kernel: _fused_forward.1
$region0: #{_fused_forward.1}
  #allocation0 [shape = 'u32[]', space=smem, size = 0x4, offset = 0x4, fixed_abs, tag = 'smem constant byte address 0x4 - core index']
  #allocation1 [shape = 'u32[72,128]{1,0:T(1,128)}', space=vmem, size = 0x9000, scoped, tag = 'internal scratch']
  #allocation2 [shape = 'f32[1]{0:T(128)S(6)}', space=smem, size = 0x200, scoped, tag = 'scoped memory for _fused_forward.1']
  %s0 = inlined_call_operand.vmem [shape: f32[2,768], index: 0, kind: input, shape index: {}]
  %s1 = inlined_call_operand.vmem [shape: f32[1,768], index: 1, kind: input, shape index: {}]
  %s2 = inlined_call_operand.<no memory space> [shape: f32[1], index: 2, kind: input, shape index: {}]
  %s3 = inlined_call_operand.vmem [shape: f32[2,1], index: 3, kind: output, shape index: {}]
  %s4 = sld [smem:[#allocation0]]
  $region22: #{_fused_forward.1} parent=0
    _
  %s6 = ssub.s32 1, %s4
  %s7 = scalar_select 0, %s6, %s4
  %8 = sst [smem:[#allocation2]] %s2
  // Predicated region
  $region2: #{_fused_forward.1} parent=0 // pred_check
    _
  $region3: #{_fused_forward.1} parent=0 // pred_check_branch
    %10 = sbr.rel (0) target = $region5
  $region4: #{_fused_forward.1} parent=0 // pred_region
    _
  $region5: #{_fused_forward.1} parent=0 // pred_fallthru
    _
  // Predicated region
  $region6: #{_fused_forward.1} parent=0 // pred_check
    _
  $region7: #{_fused_forward.1} parent=0 // pred_check_branch
    %12 = sbr.rel (0) target = $region9
  $region8: #{_fused_forward.1} parent=0 // pred_region
    _
  $region9: #{_fused_forward.1} parent=0 // pred_fallthru
    _
  // Predicated region
  $region10: #{_fused_forward.1} parent=0 // pred_check
    _
  $region11: #{_fused_forward.1} parent=0 // pred_check_branch
    %14 = sbr.rel (0) target = $region13
  $region12: #{_fused_forward.1} parent=0 // pred_region
    _
  $region13: #{_fused_forward.1} parent=0 // pred_fallthru
    _
  %v15 = vld [vmem:[%s0] sm:$0xff]
  %v16 = vld [vmem:[%s0 + $0x8] sm:$0xf]
  %v17 = vld [vmem:[%s1] sm:$0x3f]
  %v19 = vperm.slane %v17, 0
  %v20 = vperm.slane %v17, 1
  %v21 = vperm.slane %v17, 2
  %v22 = vperm.slane %v17, 3
  %v23 = vperm.slane %v17, 4
  %v24 = vperm.slane %v17, 5
  %v25 = vrot.slane %v20, 6
  %v26 = vrot.slane %v21, 4
  %v27 = vrot.slane %v22, 2
  %v28 = vrot.slane %v24, 6
  %vm29 = vcmask 1041408
  %v30 = vsel %vm29, %v19, %v25
  %vm31 = vcmask 1045508
  %v32 = vsel %vm31, %v26, %v27
  %vm33 = vcmask 1043456
  %v34 = vsel %vm33, %v30, %v32
  %v35 = vsel %vm29, %v23, %v28
  %v38 = vmul.f32 %v15, %v34
  %v39 = vmul.f32 %v16, %v35
  %v41 = vrot.slane %v38, 4
  %v43 = vadd.f32 %v38, %v41
  %v44 = vrot.slane %v38, 2
  %v46 = vrot.slane %v38, 6
  %v48 = vadd.f32 %v44, %v46
  %v49 = vadd.f32 %v43, %v39
  %v51 = vrot.slane %v39, 2
  %v53 = vadd.f32 %v48, %v51
  %v54 = vadd.f32 %v49, %v53
  %v55 = vsel %vm29, %v54, 0.0
  %56 = vadd.xlane.f32.xlu0 %v55
  %v57 = vpop.xlane.xlu0 %56
  %s58 = sld [smem:[#allocation2]]
  %v59 = vstv %s58
  %v60 = vadd.f32 %v57, %v59
  %vm61 = vcmask 1024
  %62 = vst.msk [vmem:[%s3] sm:$0x3] %vm61, %v60
  // Predicated region
  $region14: #{_fused_forward.1} parent=0 // pred_check
    _
  $region15: #{_fused_forward.1} parent=0 // pred_check_branch
    %64 = sbr.rel (0) target = $region17
  $region16: #{_fused_forward.1} parent=0 // pred_region
    _
  $region17: #{_fused_forward.1} parent=0 // pred_fallthru
    _
  // Predicated region
  $region18: #{_fused_forward.1} parent=0 // pred_check
    _
  $region19: #{_fused_forward.1} parent=0 // pred_check_branch
    %66 = sbr.rel (0) target = $region21
  $region20: #{_fused_forward.1} parent=0 // pred_region
    _
  $region21: #{_fused_forward.1} parent=0 // pred_fallthru
    _

</llo_original>
